<compile_context>
chip_gen: v7x
topology: tpu7x:2x2x1
jax: 0.10.0
libtpu: 0.0.40
codegen_flags: <defaults>
</compile_context>

<pallas_src>
import jax
import jax.numpy as jnp
from jax.experimental import pallas as pl
from jax.experimental.pallas import tpu as pltpu


# --------------------------------------------------------------------------
# Kernel body
# --------------------------------------------------------------------------
def _gate_residual_kernel(g_ref, x_ref, f_ref, o_ref):
    """g_ref: raw (pre-sigmoid) gate block, either (bm, 1) (one value per
    (batch, channel) row) or (1, bn) (per-lane row when C is folded into the
    lane axis).  x_ref/f_ref/o_ref: (bm, bn) lane-dense blocks."""
    g = jax.nn.sigmoid(g_ref[...].astype(jnp.float32))   # EUP, broadcast below
    x = x_ref[...].astype(jnp.float32)
    f = f_ref[...].astype(jnp.float32)
    # g*x + (1-g)*f  ==  f + g*(x - f)   (one fewer full-tile multiply)
    o_ref[...] = (f + g * (x - f)).astype(o_ref.dtype)


# --------------------------------------------------------------------------
# Sizing helpers
# --------------------------------------------------------------------------
def _round_up(x, q):
    return ((x + q - 1) // q) * q


def _largest_divisor_multiple(n, q, cap):
    """Largest d with d | n, d % q == 0, d <= cap.  0 if none exists."""
    if cap < q or n % q != 0:
        return 0
    m = n // q
    best = 0
    i = 1
    while i * i <= m:
        if m % i == 0:
            for d in (i, m // i):
                v = d * q
                if best < v <= cap:
                    best = v
        i += 1
    return best


def _vmem_budget():
    """(vmem_limit_bytes for the compiler, byte budget for pipeline buffers)."""
    cap = 64 * 1024 * 1024                      # conservative default (v7x per-TC)
    try:
        info = pltpu.get_tpu_info()
        cap = int(getattr(info, "vmem_capacity_bytes", cap) or cap)
    except Exception:
        pass
    # Scoped compiler limit: ~75% of physical VMEM, capped at 64 MiB
    # (v7x: 48 of 64 MiB; v5e/v6e: 64 of 128 MiB).
    vmem_limit = min((cap * 3) // 4, 64 * 1024 * 1024)
    # Double-buffered x/fused/out + gate tiles get ~75% of the limit,
    # leaving headroom for internal scratch.
    buffer_budget = (vmem_limit * 3) // 4
    return vmem_limit, buffer_budget


def _choose_blocks(M, N, itemsize, budget, gate_along_rows):
    """Pick (bm, bn): biggest (8,128)-legal blocks fitting `budget` of
    double-buffered VMEM, then trade row-block size for >=8 grid steps while
    each step keeps >=4 MiB of unique HBM traffic."""
    sub = max(8, 32 // itemsize)                # sublane quantum: f32->8, bf16->16
    rows_tileable = (M % sub == 0)
    cols_tileable = (N % 128 == 0)
    min_bm = sub if rows_tileable else M

    # ---- lane (N) block: multiple of 128 dividing N, or full extent ----
    if cols_tileable:
        if gate_along_rows:
            avail = budget - 2 * max(min_bm, 8) * 128 * 4      # (bm,1) gate pad
            per_col = 6 * min_bm * itemsize                    # x, f, out, x2 bufs
        else:
            avail = budget
            per_col = 6 * min_bm * itemsize + 2 * 8 * 4        # (1,bn) gate pad
        cap_bn = max(128, (avail // per_col) // 128 * 128)
        bn = _largest_divisor_multiple(N, 128, min(N, cap_bn)) or 128
    else:
        bn = N          # full-extent lane block (legal); small / odd H*W case
        # TODO(synk): if N is both huge and not 128-aligned, pad N to a
        # multiple of 128 in the wrapper instead of one giant lane block.

    # ---- sublane (M) block ----
    if rows_tileable:
        if gate_along_rows:
            per_row = 6 * bn * itemsize + 2 * 128 * 4
            avail = budget
        else:
            per_row = 6 * bn * itemsize
            avail = budget - 2 * 8 * _round_up(bn, 128) * 4
        cap_rows = max(sub, avail // per_row)
        bm = _largest_divisor_multiple(M, sub, min(M, cap_rows)) or sub

        # Prefer >=8 grid steps (>=4 per v7x TensorCore) while each step still
        # moves >=4 MiB of unique traffic (keeps per-step overhead <~10%).
        MIN_STEP_UNIQUE = 4 * 1024 * 1024
        n_col_steps = pl.cdiv(N, bn)
        while pl.cdiv(M, bm) * n_col_steps < 8 and bm > sub:
            cand = _largest_divisor_multiple(M, sub, bm // 2)
            if cand == 0 or 3 * cand * bn * itemsize < MIN_STEP_UNIQUE:
                break
            bm = cand
        # Mid-size tensors: at least split once so both v7x TCs get work.
        if pl.cdiv(M, bm) * n_col_steps == 1:
            half = _largest_divisor_multiple(M, sub, M // 2)
            if half and 3 * half * bn * itemsize >= 2 * 1024 * 1024:
                bm = half
    else:
        bm = M          # full-extent row block (row count is B on this path)

    return bm, bn


# --------------------------------------------------------------------------
# Public wrapper
# --------------------------------------------------------------------------
def learnable_gate_residual(x_in, fused_features, gate_param):
    """x_in, fused_features: [B, C, H, W].  gate_param: [1, C, 1, 1] raw
    (pre-sigmoid) learnable gate, one value per channel."""
    B, C, H, W = x_in.shape
    assert fused_features.shape == x_in.shape
    HW = H * W
    itemsize = jnp.dtype(x_in.dtype).itemsize
    sub = max(8, 32 // itemsize)

    vmem_limit, budget = _vmem_budget()
    gate_c = gate_param.reshape(C).astype(jnp.float32)     # raw, tiny

    # Layout choice: keep H*W on the lane axis when it is 128-aligned and the
    # row count (B*C) tiles cleanly; otherwise fold C into the lane axis so
    # stores stay lane-dense and the row count becomes just B.
    if HW % 128 == 0 and (B * C) % sub == 0:
        M, N = B * C, HW
        x2 = x_in.reshape(M, N)                             # contiguous, no HBM pass
        f2 = fused_features.reshape(M, N)
        g = jnp.broadcast_to(gate_c.reshape(1, C), (B, C)).reshape(M, 1)
        gate_along_rows = True
    else:
        M, N = B, C * HW
        x2 = x_in.reshape(M, N)
        f2 = fused_features.reshape(M, N)
        g = jnp.broadcast_to(gate_c.reshape(C, 1), (C, HW)).reshape(1, N)
        gate_along_rows = False

    bm, bn = _choose_blocks(M, N, itemsize, budget, gate_along_rows)
    grid = (pl.cdiv(M, bm), pl.cdiv(N, bn))

    if gate_along_rows:
        g_spec = pl.BlockSpec((bm, 1), lambda i, j: (i, 0))
    else:
        g_spec = pl.BlockSpec((1, bn), lambda i, j: (0, j))

    out2 = pl.pallas_call(
        _gate_residual_kernel,
        out_shape=jax.ShapeDtypeStruct((M, N), x_in.dtype),
        grid_spec=pltpu.PrefetchScalarGridSpec(
            num_scalar_prefetch=0,
            grid=grid,
            in_specs=[
                g_spec,
                pl.BlockSpec((bm, bn), lambda i, j: (i, j)),   # x_in
                pl.BlockSpec((bm, bn), lambda i, j: (i, j)),   # fused
            ],
            out_specs=pl.BlockSpec((bm, bn), lambda i, j: (i, j)),
        ),
        compiler_params=pltpu.CompilerParams(
            dimension_semantics=("parallel", "parallel"),
            vmem_limit_bytes=vmem_limit,
        ),
    )(g, x2, f2)

    return out2.reshape(B, C, H, W)


def _reference(x_in, fused_features, gate_param):
    """Pure-JAX reference matching the PyTorch forward."""
    g = jax.nn.sigmoid(gate_param)                          # (1, C, 1, 1)
    return g * x_in + (1.0 - g) * fused_features


# --------------------------------------------------------------------------
# Self-test
# --------------------------------------------------------------------------
if __name__ == "__main__":
    key = jax.random.PRNGKey(0)

    def _run_case(B, C, H, W, key):
        k_x, k_f, k_g, key = jax.random.split(key, 4)
        x_in = jax.random.normal(k_x, (B, C, H, W), dtype=jnp.float32)
        fused = jax.random.normal(k_f, (B, C, H, W), dtype=jnp.float32)
        # Module initializes the gate to 0.5*ones; perturb so per-channel
        # gating is actually exercised (the parameter is learnable anyway).
        gate = 0.5 * jnp.ones((1, C, 1, 1), jnp.float32) \
            + 0.3 * jax.random.normal(k_g, (1, C, 1, 1), dtype=jnp.float32)
        out = jax.block_until_ready(learnable_gate_residual(x_in, fused, gate))
        ref = _reference(x_in, fused, gate)
        assert out.shape == (B, C, H, W)
        err = float(jnp.max(jnp.abs(out - ref)))
        assert jnp.allclose(out, ref, atol=1e-5, rtol=1e-5), f"max err {err}"
        return key

    # Case 1: lane-aligned spatial (H*W % 128 == 0) -> (B*C, H*W) layout.
    key = _run_case(2, 4, 16, 16, key)
    # Case 2: odd spatial / channels -> (B, C*H*W) lane-dense fallback layout.
    key = _run_case(2, 3, 14, 14, key)

    print("KERNEL_OK")
</pallas_src>

<mosaic_0001>
module attributes {stable_mosaic.version = 11 : i64} {
  func.func @_gate_residual_kernel(%arg0: i32, %arg1: i32, %arg2: memref<8x1xf32, #tpu.memory_space<vmem>>, %arg3: memref<8x256xf32, #tpu.memory_space<vmem>>, %arg4: memref<8x256xf32, #tpu.memory_space<vmem>>, %arg5: memref<8x256xf32, #tpu.memory_space<vmem>>) attributes {dimension_semantics = [#tpu.dimension_semantics<parallel>, #tpu.dimension_semantics<parallel>], iteration_bounds = array<i64: 1, 1>, scalar_prefetch = 0 : i64, scratch_operands = 0 : i64, tpu.core_type = #tpu.core_type<tc>, window_params = [{transform_indices = @transform_0, window_bounds = array<i64: 8, 1>}, {transform_indices = @transform_1, window_bounds = array<i64: 8, 256>}, {transform_indices = @transform_2, window_bounds = array<i64: 8, 256>}, {transform_indices = @transform_3, window_bounds = array<i64: 8, 256>}]} {
    %c0 = arith.constant 0 : index
    %c0_0 = arith.constant 0 : index
    %0 = vector.load %arg2[%c0, %c0_0] : memref<8x1xf32, #tpu.memory_space<vmem>>, vector<8x1xf32>
    %1 = arith.negf %0 : vector<8x1xf32>
    %2 = math.exp %1 : vector<8x1xf32>
    %cst = arith.constant 1.000000e+00 : f32
    %3 = vector.broadcast %cst : f32 to vector<8x1xf32>
    %4 = arith.addf %3, %2 : vector<8x1xf32>
    %5 = arith.divf %3, %4 : vector<8x1xf32>
    %c0_1 = arith.constant 0 : index
    %c0_2 = arith.constant 0 : index
    %6 = vector.load %arg3[%c0_1, %c0_2] : memref<8x256xf32, #tpu.memory_space<vmem>>, vector<8x256xf32>
    %c0_3 = arith.constant 0 : index
    %c0_4 = arith.constant 0 : index
    %7 = vector.load %arg4[%c0_3, %c0_4] : memref<8x256xf32, #tpu.memory_space<vmem>>, vector<8x256xf32>
    %8 = arith.subf %6, %7 : vector<8x256xf32>
    %9 = vector.broadcast %5 : vector<8x1xf32> to vector<8x256xf32>
    %10 = arith.mulf %9, %8 : vector<8x256xf32>
    %11 = arith.addf %7, %10 : vector<8x256xf32>
    %c0_5 = arith.constant 0 : index
    %c0_6 = arith.constant 0 : index
    %12 = vector.load %arg5[%c0_5, %c0_6] : memref<8x256xf32, #tpu.memory_space<vmem>>, vector<8x256xf32>
    tpu.vector_store %arg5[%c0_5, %c0_6], %11 {strides = array<i32>} : memref<8x256xf32, #tpu.memory_space<vmem>>, vector<8x256xf32>,
    return
  }
  func.func @transform_0(%arg0: i32, %arg1: i32) -> (i32, i32) {
    %c0_i32 = arith.constant 0 : i32
    %c0_i32_0 = arith.constant 0 : i32
    return %arg0, %c0_i32 : i32, i32
  }
  func.func @transform_1(%arg0: i32, %arg1: i32) -> (i32, i32) {
    %c0_i32 = arith.constant 0 : i32
    return %arg0, %arg1 : i32, i32
  }
  func.func @transform_2(%arg0: i32, %arg1: i32) -> (i32, i32) {
    %c0_i32 = arith.constant 0 : i32
    return %arg0, %arg1 : i32, i32
  }
  func.func @transform_3(%arg0: i32, %arg1: i32) -> (i32, i32) {
    %c0_i32 = arith.constant 0 : i32
    return %arg0, %arg1 : i32, i32
  }
}

</mosaic_0001>

<llo_original>
// kernel: tpu_custom_call.1
$region0: #{tpu_custom_call.1}
  #allocation0 [shape = 'u32[]', space=smem, size = 0x4, offset = 0x4, fixed_abs, tag = 'smem constant byte address 0x4 - core index']
  #allocation1 [shape = 'u32[144,128]{1,0:T(1,128)}', space=vmem, size = 0x12000, scoped, tag = 'internal scratch']
  %s0 = inlined_call_operand.vmem [shape: f32[8,1], index: 0, kind: input, shape index: {}]
  %s1 = inlined_call_operand.hbm [shape: f32[8,256], index: 1, kind: input, shape index: {}]
  %s2 = inlined_call_operand.vmem [shape: f32[8,256], index: 2, kind: input, shape index: {}]
  %s3 = inlined_call_operand.hbm [shape: f32[8,256], index: 3, kind: output, shape index: {}]
  %s4 = sld [smem:[#allocation0]]
  $region26: #{tpu_custom_call.1} parent=0
    _
  %s6 = ssub.s32 1, %s4
  %s7 = scalar_select 0, %s6, %s4
  $region1: #{tpu_custom_call.1} parent=0
    #allocation2 [shape = 'u8[8192]{0}', space=vmem, size = 0x2000, scoped, tag = 'input window, operand 1, single buffered']
    #allocation3 [shape = 's32[1]{0}', space=sflag, size = 0x4, scoped, tag = 'scoped memory for tpu_custom_call.1']
    #allocation4 [shape = 's32[1]{0}', space=sflag, size = 0x4, scoped, tag = 'scoped memory for tpu_custom_call.1']
    #allocation5 [shape = 'u8[8192]{0}', space=vmem, size = 0x2000, scoped, tag = 'output window, operand 0, single buffered']
    %8 = vsyncpa [#allocation3], 0
    %9 = vsyncpa [#allocation4], 0
    // Predicated region
    $region2: #{tpu_custom_call.1} parent=1 // pred_check
      _
    $region3: #{tpu_custom_call.1} parent=1 // pred_check_branch
      %11 = sbr.rel (0) target = $region5
    $region4: #{tpu_custom_call.1} parent=1 // pred_region
      _
    $region5: #{tpu_custom_call.1} parent=1 // pred_fallthru
      _
    // Predicated region
    $region6: #{tpu_custom_call.1} parent=1 // pred_check
      _
    $region7: #{tpu_custom_call.1} parent=1 // pred_check_branch
      %13 = sbr.rel (0) target = $region9
    $region8: #{tpu_custom_call.1} parent=1 // pred_region
      %s15 = ssub.s32 256, 256
      %16 = vsyncadd [#allocation3], %s15
      %s18 = sshll.u32 [#allocation2], 4
      %s19 = int_to_ptr.vmem [resolvable:$true] %s18
      %21 = dma.hbm_to_vmem [thread:$0]  %s1, 256, %s19, [#allocation3]
    $region9: #{tpu_custom_call.1} parent=1 // pred_fallthru
      _
    // Predicated region
    $region10: #{tpu_custom_call.1} parent=1 // pred_check
      _
    $region11: #{tpu_custom_call.1} parent=1 // pred_check_branch
      %23 = sbr.rel (0) target = $region13
    $region12: #{tpu_custom_call.1} parent=1 // pred_region
      _
    $region13: #{tpu_custom_call.1} parent=1 // pred_fallthru
      _
    // Predicated region
    $region14: #{tpu_custom_call.1} parent=1 // pred_check
      _
    $region15: #{tpu_custom_call.1} parent=1 // pred_check_branch
      %25 = sbr.rel (0) target = $region17
    $region16: #{tpu_custom_call.1} parent=1 // pred_region
      %26 = dma.done [#allocation3], 256
    $region17: #{tpu_custom_call.1} parent=1 // pred_fallthru
      _
    %v27 = vld [vmem:[%s0] sm:$0xff]
    %v28 = vxor.u32 %v27, 2147483648
    %v29 = vmul.f32 %v28, 1.442695
    %v30 = vpow.pop %v29
    %v31 = vadd.f32 %v30, 1.0
    %v32 = vrcp.pop %v31
    %v33 = vmul.f32 1.0, %v32
    %v34 = vld [vmem:[#allocation2] sm:$0xff]
    %v35 = vld [vmem:[#allocation2 + $0x8] sm:$0xff]
    %v36 = vld [vmem:[%s2] sm:$0xff]
    %v37 = vld [vmem:[%s2 + $0x8] sm:$0xff]
    %v38 = vsub.f32 %v34, %v36
    %v39 = vsub.f32 %v35, %v37
    %41 = vset.pattern.permute.xlu0 0
    %42 = vperm.xlu0 %41, %v33
    %v43 = vpop.permute.xlu0 %42
    %v45 = vmul.f32 %v43, %v38
    %v46 = vmul.f32 %v43, %v39
    %v47 = vadd.f32 %v36, %v45
    %v48 = vadd.f32 %v37, %v46
    %49 = vst [vmem:[#allocation5] sm:$0xff] %v47
    %50 = vst [vmem:[#allocation5 + $0x8] sm:$0xff] %v48
    // Predicated region
    $region18: #{tpu_custom_call.1} parent=1 // pred_check
      _
    $region19: #{tpu_custom_call.1} parent=1 // pred_check_branch
      %52 = sbr.rel (0) target = $region21
    $region20: #{tpu_custom_call.1} parent=1 // pred_region
      %s54 = ssub.s32 256, 256
      %55 = vsyncadd [#allocation4], %s54
      %s57 = sshll.u32 [#allocation5], 4
      %s58 = int_to_ptr.vmem [resolvable:$true] %s57
      %60 = dma.vmem_to_hbm [thread:$0]  %s58, 256, %s3, [#allocation4]
    $region21: #{tpu_custom_call.1} parent=1 // pred_fallthru
      _
    // Predicated region
    $region22: #{tpu_custom_call.1} parent=1 // pred_check
      _
    $region23: #{tpu_custom_call.1} parent=1 // pred_check_branch
      %62 = sbr.rel (0) target = $region25
    $region24: #{tpu_custom_call.1} parent=1 // pred_region
      %63 = dma.done [#allocation4], 256
    $region25: #{tpu_custom_call.1} parent=1 // pred_fallthru
      _
    %64 = vsyncpa [#allocation3], 1
    %65 = vsyncpa [#allocation4], 1

</llo_original>
